<compile_context>
chip_gen: v7x
topology: tpu7x:2x2x1
jax: 0.10.0
libtpu: 0.0.40
codegen_flags: <defaults>
</compile_context>

<pallas_src>
import math

import jax
import jax.numpy as jnp
from jax.experimental import pallas as pl
from jax.experimental.pallas import tpu as pltpu

_LANE = 128
# Minimum sublane tile per dtype itemsize: f32 -> 8, bf16 -> 16, int8/fp8 -> 32.
_SUBLANE_MIN = {4: 8, 2: 16, 1: 32}
# Per-block byte budget.  Pallas double-buffers input + output, so resident
# VMEM ~= 4x this (~16 MiB) plus Mosaic scratch — inside the raised scoped
# limit below on v5e/v6e (128 MiB physical) and v7x (64 MiB physical).
_BLOCK_BYTES = 4 << 20
# Scoped-VMEM limit: above the v5e default (16 MiB) so 4 MiB blocks land, and
# <= ~48 MiB so we never crowd v7x's 64 MiB physical VMEM.
_VMEM_LIMIT_BYTES = 48 << 20
# Cap lane width so large arrays still produce a multi-step grid.
_MAX_COLS = 8192
# Lane-dense column count for flat sizes not divisible by 128 (tail padded).
_FALLBACK_COLS = 1024
# Keep at least this many grid steps when the array is large enough: pipeline
# overlap (prefetch/writeback) + v7x 2-TensorCore fan-out.
_TARGET_STEPS = 4


def _copy_kernel(x_ref, o_ref):
    # Identity data movement — all a contiguous .view() does to the buffer.
    o_ref[...] = x_ref[...]


def _plan_2d(total, itemsize):
    """Factor a flat element count into a lane-dense (rows, cols) layout plus a
    row-tile size.  Returns (rows, cols, tile_r, padded_total)."""
    if itemsize not in _SUBLANE_MIN:
        raise ValueError(f"View kernel: unsupported dtype itemsize {itemsize}")
    sub = _SUBLANE_MIN[itemsize]

    if total % _LANE == 0:
        # Largest multiple of 128 that divides `total`, capped at _MAX_COLS.
        c = (min(total, _MAX_COLS) // _LANE) * _LANE
        while c >= _LANE and total % c:
            c -= _LANE
        cols = c
        padded_total = total
    else:
        # Fixed lane-dense width; the tail is padded in the wrapper so VMEM
        # usage stays independent of `total` (no (1, total) mega-block).
        cols = _FALLBACK_COLS
        padded_total = -(-total // cols) * cols

    rows = padded_total // cols

    if rows <= sub:
        # Tiny: whole row axis in one block (full-array dims are exempt from
        # the (8,128) block-divisibility rule).
        return rows, cols, rows, padded_total

    # Row tile: as large as the per-block byte budget allows ...
    cap = max(sub, (_BLOCK_BYTES // (cols * itemsize)) // sub * sub)
    # ... but small enough to keep ~_TARGET_STEPS grid steps for overlap /
    # megacore fan-out.
    want = -(-rows // _TARGET_STEPS)          # ceil(rows / target_steps)
    want = max(sub, -(-want // sub) * sub)    # round up to sublane multiple
    tile_r = min(cap, want)
    if tile_r >= rows:
        tile_r = rows
    return rows, cols, tile_r, padded_total


def _pallas_identity_copy(x):
    """Copy a contiguous buffer once through a Pallas TPU kernel using a
    lane-dense 2-D tiling.  Returns the flat copied buffer (length = x.size)."""
    total = math.prod(x.shape) if x.shape else 1
    itemsize = jnp.dtype(x.dtype).itemsize
    rows, cols, tile_r, padded_total = _plan_2d(total, itemsize)

    flat = jnp.reshape(x, (total,))  # metadata-only (contiguous buffer)
    if padded_total != total:
        # TODO(synk): the pad/slice round trip adds HBM traffic; only taken
        # when the flat size is not a multiple of 128.
        flat = jnp.pad(flat, (0, padded_total - total))
    x2d = jnp.reshape(flat, (rows, cols))

    grid = (pl.cdiv(rows, tile_r),)  # partial last block is masked by Pallas

    out2d = pl.pallas_call(
        _copy_kernel,
        out_shape=jax.ShapeDtypeStruct((rows, cols), x.dtype),
        grid_spec=pltpu.PrefetchScalarGridSpec(
            num_scalar_prefetch=0,
            grid=grid,
            in_specs=[pl.BlockSpec((tile_r, cols), lambda i: (i, 0))],
            out_specs=pl.BlockSpec((tile_r, cols), lambda i: (i, 0)),
        ),
        compiler_params=pltpu.CompilerParams(
            dimension_semantics=("parallel",),
            vmem_limit_bytes=_VMEM_LIMIT_BYTES,
        ),
        cost_estimate=pl.CostEstimate(
            flops=0,
            transcendentals=0,
            bytes_accessed=2 * padded_total * itemsize,
        ),
    )(x2d)

    out_flat = jnp.reshape(out2d, (padded_total,))
    if padded_total != total:
        out_flat = out_flat[:total]
    return out_flat


class View:
    """JAX/Pallas equivalent of the PyTorch View module."""

    def __init__(self, shape):
        self.shape = tuple(shape)

    def __repr__(self):
        return f"View{self.shape}"

    def __call__(self, x):
        batch_dims = x.shape[:-1]
        last = x.shape[-1]
        assert last == int(math.prod(self.shape)), (
            f"cannot view trailing dim {last} as {self.shape}"
        )
        # TODO(synk): a contiguous view is pure metadata (jnp.reshape); the
        # single-pass Pallas copy below exists only to materialize the op as
        # a kernel and is strictly slower than not copying.
        out_flat = _pallas_identity_copy(x)
        # Metadata-only reshape to the target view shape (like torch .view()).
        return jnp.reshape(out_flat, (*batch_dims, *self.shape))


if __name__ == "__main__":
    k1, k2, k3 = jax.random.split(jax.random.PRNGKey(0), 3)

    # Small case: (batch=2, seq=4, hidden=32); View((4, 8)) -> (2, 4, 4, 8).
    # Plan: flat 256 elems -> (rows=1, cols=256), single full-dim block.
    x = jax.random.normal(k1, (2, 4, 32), dtype=jnp.float32)
    view = View((4, 8))
    out = jax.block_until_ready(view(x))
    ref = jnp.reshape(x, (2, 4, 4, 8))
    assert out.shape == (2, 4, 4, 8), out.shape
    assert out.dtype == x.dtype
    assert bool(jnp.allclose(out, ref)), "mismatch vs reference reshape (small)"

    # Larger case exercising the multi-step pipelined path (2 MiB f32):
    # flat 524288 elems -> (rows=64, cols=8192), tile_r=16 -> 4 parallel
    # 512 KiB blocks (overlapped prefetch/writeback, feeds both v7x TCs).
    x2 = jax.random.normal(k2, (8, 128, 512), dtype=jnp.float32)
    view2 = View((16, 32))
    out2 = jax.block_until_ready(view2(x2))
    ref2 = jnp.reshape(x2, (8, 128, 16, 32))
    assert out2.shape == (8, 128, 16, 32), out2.shape
    assert bool(jnp.allclose(out2, ref2)), "mismatch vs reference reshape (large)"

    # Non-128-divisible flat size exercising the padded lane-dense fallback:
    # flat 90 elems -> pad to (rows=1, cols=1024), slice back to 90.
    x3 = jax.random.normal(k3, (3, 5, 6), dtype=jnp.float32)
    view3 = View((2, 3))
    out3 = jax.block_until_ready(view3(x3))
    ref3 = jnp.reshape(x3, (3, 5, 2, 3))
    assert out3.shape == (3, 5, 2, 3), out3.shape
    assert bool(jnp.allclose(out3, ref3)), "mismatch vs reference reshape (ragged)"

    print("KERNEL_OK")
</pallas_src>

<mosaic_0001>
module attributes {stable_mosaic.version = 11 : i64} {
  func.func @_copy_kernel(%arg0: i32, %arg1: memref<1x256xf32, #tpu.memory_space<vmem>>, %arg2: memref<1x256xf32, #tpu.memory_space<vmem>>) attributes {dimension_semantics = [#tpu.dimension_semantics<parallel>], iteration_bounds = array<i64: 1>, scalar_prefetch = 0 : i64, scratch_operands = 0 : i64, tpu.core_type = #tpu.core_type<tc>, window_params = [{transform_indices = @transform_0, window_bounds = array<i64: 1, 256>}, {transform_indices = @transform_1, window_bounds = array<i64: 1, 256>}]} {
    %c0 = arith.constant 0 : index
    %c0_0 = arith.constant 0 : index
    %0 = vector.load %arg1[%c0, %c0_0] : memref<1x256xf32, #tpu.memory_space<vmem>>, vector<1x256xf32>
    %c0_1 = arith.constant 0 : index
    %c0_2 = arith.constant 0 : index
    %1 = vector.load %arg2[%c0_1, %c0_2] : memref<1x256xf32, #tpu.memory_space<vmem>>, vector<1x256xf32>
    tpu.vector_store %arg2[%c0_1, %c0_2], %0 {strides = array<i32>} : memref<1x256xf32, #tpu.memory_space<vmem>>, vector<1x256xf32>,
    return
  }
  func.func @transform_0(%arg0: i32) -> (i32, i32) {
    %c0_i32 = arith.constant 0 : i32
    %c0_i32_0 = arith.constant 0 : i32
    return %arg0, %c0_i32 : i32, i32
  }
  func.func @transform_1(%arg0: i32) -> (i32, i32) {
    %c0_i32 = arith.constant 0 : i32
    %c0_i32_0 = arith.constant 0 : i32
    return %arg0, %c0_i32 : i32, i32
  }
}

</mosaic_0001>

<llo_original>
// kernel: tpu_custom_call.1
$region0: #{tpu_custom_call.1}
  #allocation0 [shape = 'u32[]', space=smem, size = 0x4, offset = 0x4, fixed_abs, tag = 'smem constant byte address 0x4 - core index']
  #allocation1 [shape = 'u32[144,128]{1,0:T(1,128)}', space=vmem, size = 0x12000, scoped, tag = 'internal scratch']
  %s0 = inlined_call_operand.hbm [shape: f32[1,256], index: 0, kind: input, shape index: {}]
  %s1 = inlined_call_operand.hbm [shape: f32[1,256], index: 1, kind: output, shape index: {}]
  %s2 = sld [smem:[#allocation0]]
  $region18: #{tpu_custom_call.1} parent=0
    _
  %s4 = ssub.s32 1, %s2
  %s5 = scalar_select 0, %s4, %s2
  $region1: #{tpu_custom_call.1} parent=0
    #allocation2 [shape = 'u8[1024]{0}', space=vmem, size = 0x400, scoped, tag = 'input window, operand 0, single buffered']
    #allocation3 [shape = 's32[1]{0}', space=sflag, size = 0x4, scoped, tag = 'scoped memory for tpu_custom_call.1']
    #allocation4 [shape = 's32[1]{0}', space=sflag, size = 0x4, scoped, tag = 'scoped memory for tpu_custom_call.1']
    #allocation5 [shape = 'u8[1024]{0}', space=vmem, size = 0x400, scoped, tag = 'output window, operand 0, single buffered']
    %6 = vsyncpa [#allocation3], 0
    %7 = vsyncpa [#allocation4], 0
    // Predicated region
    $region2: #{tpu_custom_call.1} parent=1 // pred_check
      _
    $region3: #{tpu_custom_call.1} parent=1 // pred_check_branch
      %9 = sbr.rel (0) target = $region5
    $region4: #{tpu_custom_call.1} parent=1 // pred_region
      %s11 = ssub.s32 32, 32
      %12 = vsyncadd [#allocation3], %s11
      %s14 = sshll.u32 [#allocation2], 4
      %s15 = int_to_ptr.vmem [resolvable:$true] %s14
      %17 = dma.hbm_to_vmem [thread:$0]  %s0, 32, %s15, [#allocation3]
    $region5: #{tpu_custom_call.1} parent=1 // pred_fallthru
      _
    // Predicated region
    $region6: #{tpu_custom_call.1} parent=1 // pred_check
      _
    $region7: #{tpu_custom_call.1} parent=1 // pred_check_branch
      %19 = sbr.rel (0) target = $region9
    $region8: #{tpu_custom_call.1} parent=1 // pred_region
      %20 = dma.done [#allocation3], 32
    $region9: #{tpu_custom_call.1} parent=1 // pred_fallthru
      _
    %v21 = vld [vmem:[#allocation2] sm:$0x3]
    %v22 = vlaneseq
    %vm23 = vcmp.ge.s32.totalorder %v22, 0
    %vm24 = vcmp.lt.s32.totalorder %v22, 256
    %vm25 = vmand %vm23, %vm24
    %26 = vst.msk [vmem:[#allocation5] sm:$0x3] %vm25, %v21
    // Predicated region
    $region10: #{tpu_custom_call.1} parent=1 // pred_check
      _
    $region11: #{tpu_custom_call.1} parent=1 // pred_check_branch
      %28 = sbr.rel (0) target = $region13
    $region12: #{tpu_custom_call.1} parent=1 // pred_region
      %s30 = ssub.s32 32, 32
      %31 = vsyncadd [#allocation4], %s30
      %s33 = sshll.u32 [#allocation5], 4
      %s34 = int_to_ptr.vmem [resolvable:$true] %s33
      %36 = dma.vmem_to_hbm [thread:$0]  %s34, 32, %s1, [#allocation4]
    $region13: #{tpu_custom_call.1} parent=1 // pred_fallthru
      _
    // Predicated region
    $region14: #{tpu_custom_call.1} parent=1 // pred_check
      _
    $region15: #{tpu_custom_call.1} parent=1 // pred_check_branch
      %38 = sbr.rel (0) target = $region17
    $region16: #{tpu_custom_call.1} parent=1 // pred_region
      %39 = dma.done [#allocation4], 32
    $region17: #{tpu_custom_call.1} parent=1 // pred_fallthru
      _
    %40 = vsyncpa [#allocation3], 1
    %41 = vsyncpa [#allocation4], 1

</llo_original>
